<compile_context>
chip_gen: v7x
topology: tpu7x:2x2x1
jax: 0.10.0
libtpu: 0.0.40
codegen_flags: <defaults>
</compile_context>

<pallas_src>
import functools

import jax
import jax.numpy as jnp
from jax.experimental import pallas as pl
from jax.experimental.pallas import tpu as pltpu

LANE = 128          # lane width: pad feature dims to this
TILE = 128          # row / K tile for the A_hat sweep
VMEM_LIMIT = 32 * 1024 * 1024   # explicit scoped-VMEM limit (safe on v5e/v6e/v7x)


def _round_up(x, m):
    return (x + m - 1) // m * m


def _pad2d(x, rows, cols):
    return jnp.pad(x, ((0, rows - x.shape[0]), (0, cols - x.shape[1])))


# ----------------------- kernel 1: XW = X @ W (per layer, once) -------------------- #
def _xw_kernel(x_ref, w_ref, o_ref):
    acc = jnp.dot(x_ref[...], w_ref[...], preferred_element_type=jnp.float32)
    o_ref[...] = acc.astype(o_ref.dtype)


def feature_transform(x_bf16, w_bf16, *, tm=TILE, tn=LANE):
    """x_bf16: [N_pad, F_in_pad] bf16, w_bf16: [F_in_pad, F_out_pad] bf16 -> bf16 XW."""
    n_pad, f_in_pad = x_bf16.shape
    f_out_pad = w_bf16.shape[1]
    grid = (n_pad // tm, f_out_pad // tn)
    flops = 2 * n_pad * f_in_pad * f_out_pad
    bytes_accessed = 2 * (x_bf16.size + w_bf16.size + n_pad * f_out_pad)
    return pl.pallas_call(
        _xw_kernel,
        out_shape=jax.ShapeDtypeStruct((n_pad, f_out_pad), jnp.bfloat16),
        grid=grid,
        in_specs=[
            pl.BlockSpec((tm, f_in_pad), lambda i, j: (i, 0)),
            pl.BlockSpec((f_in_pad, tn), lambda i, j: (0, j)),
        ],
        out_specs=pl.BlockSpec((tm, tn), lambda i, j: (i, j)),
        compiler_params=pltpu.CompilerParams(
            dimension_semantics=("parallel", "parallel"),
            vmem_limit_bytes=VMEM_LIMIT,
        ),
        cost_estimate=pl.CostEstimate(
            flops=flops, transcendentals=0, bytes_accessed=bytes_accessed),
    )(x_bf16, w_bf16)


# -------------- kernel 2: tiled A_hat @ XW + bias (+ReLU), f32 accumulator ---------- #
def _agg_kernel(a_ref, xw_ref, b_ref, o_ref, acc_ref, *, apply_relu: bool):
    k = pl.program_id(2)

    @pl.when(k == 0)
    def _():
        acc_ref[...] = jnp.zeros_like(acc_ref)

    acc_ref[...] += jnp.dot(a_ref[...], xw_ref[...],
                            preferred_element_type=jnp.float32)

    @pl.when(k == pl.num_programs(2) - 1)
    def _():
        h = acc_ref[...] + b_ref[...]          # bias + activation in f32 (VPU)
        if apply_relu:
            h = jnp.maximum(h, 0.0)
        o_ref[...] = h.astype(o_ref.dtype)


def gcn_aggregate(a_bf16, xw_bf16, b_f32, *, apply_relu, tm=TILE, tn=LANE, tk=TILE):
    """a_bf16: [N_pad, N_pad], xw_bf16: [N_pad, F_out_pad], b_f32: [1, F_out_pad]."""
    n_pad = a_bf16.shape[0]
    f_out_pad = xw_bf16.shape[1]
    grid = (n_pad // tm, f_out_pad // tn, n_pad // tk)
    kernel = functools.partial(_agg_kernel, apply_relu=apply_relu)
    flops = 2 * n_pad * n_pad * f_out_pad
    bytes_accessed = 2 * a_bf16.size + 2 * xw_bf16.size + 4 * n_pad * f_out_pad
    return pl.pallas_call(
        kernel,
        out_shape=jax.ShapeDtypeStruct((n_pad, f_out_pad), jnp.float32),
        grid=grid,
        in_specs=[
            pl.BlockSpec((tm, tk), lambda i, j, k: (i, k)),   # A_hat tile
            pl.BlockSpec((tk, tn), lambda i, j, k: (k, j)),   # XW tile
            pl.BlockSpec((1, tn), lambda i, j, k: (0, j)),    # bias tile
        ],
        out_specs=pl.BlockSpec((tm, tn), lambda i, j, k: (i, j)),
        scratch_shapes=[pltpu.VMEM((tm, tn), jnp.float32)],
        compiler_params=pltpu.CompilerParams(
            dimension_semantics=("parallel", "parallel", "arbitrary"),
            vmem_limit_bytes=VMEM_LIMIT,
        ),
        cost_estimate=pl.CostEstimate(
            flops=flops, transcendentals=0, bytes_accessed=bytes_accessed),
    )(a_bf16, xw_bf16, b_f32)


def gcn_layer(a_hat_bf16, h_f32, w_pad_f32, b_pad_f32, *, apply_relu):
    """One GCNConv layer on padded operands; returns [N_pad, F_out_pad] f32."""
    xw = feature_transform(h_f32.astype(jnp.bfloat16),
                           w_pad_f32.astype(jnp.bfloat16))
    return gcn_aggregate(a_hat_bf16, xw, b_pad_f32, apply_relu=apply_relu)


# ------------------------------- JAX glue ---------------------------------- #
def normalized_adjacency(edge_index, num_nodes):
    """Dense A_hat matching PyG GCNConv on SparseTensor.from_edge_index(edge_index):
      adj[e0, e1] += 1 per edge (parallel edges summed),
      diagonal overwritten with 1.0 (fill_diag), then D^{-1/2} A D^{-1/2}."""
    row, col = edge_index[0], edge_index[1]
    a = jnp.zeros((num_nodes, num_nodes), jnp.float32).at[row, col].add(1.0)
    eye = jnp.eye(num_nodes, dtype=jnp.float32)
    a = a * (1.0 - eye) + eye
    deg = jnp.sum(a, axis=1)
    d_inv_sqrt = jnp.where(deg > 0, jax.lax.rsqrt(deg), 0.0)
    return d_inv_sqrt[:, None] * a * d_inv_sqrt[None, :]


def glorot(key, shape):
    fan_in, fan_out = shape
    limit = jnp.sqrt(6.0 / (fan_in + fan_out))
    return jax.random.uniform(key, shape, jnp.float32, -limit, limit)


def init_gnn_encoder_params(key, in_channels, hidden_channels, out_channels,
                            num_layers=2):
    """Parameter init mirroring GNN_Encoder.__init__ (layer='gcn')."""
    params = []
    keys = jax.random.split(key, num_layers)
    for i in range(num_layers):
        first = in_channels if i == 0 else hidden_channels
        second = out_channels if i == num_layers - 1 else hidden_channels
        w = glorot(keys[i], (first, second))
        b = jnp.zeros((second,), jnp.float32)
        params.append((w, b))
    return params


def gnn_encoder_forward(params, x, edge_index):
    """relu(GCN(...)) applied num_layers times (activation after the last layer too)."""
    n, f_in = x.shape
    n_pad = _round_up(max(n, TILE), TILE)

    a_hat = normalized_adjacency(edge_index, n)
    a_hat_p = _pad2d(a_hat, n_pad, n_pad).astype(jnp.bfloat16)

    h = _pad2d(x.astype(jnp.float32), n_pad, _round_up(f_in, LANE))
    for (w, b) in params:
        f_out = w.shape[1]
        f_out_pad = _round_up(f_out, LANE)
        w_p = _pad2d(w, h.shape[1], f_out_pad)                 # zero-pad weight
        b_p = jnp.pad(b, (0, f_out_pad - f_out)).reshape(1, f_out_pad)
        h = gcn_layer(a_hat_p, h, w_p, b_p, apply_relu=True)
    return h[:n, :params[-1][0].shape[1]]


def _reference_forward(params, x, edge_index):
    """Plain-JAX f32 reference for a tolerance check."""
    a_hat = normalized_adjacency(edge_index, x.shape[0])
    h = x
    for (w, b) in params:
        h = jnp.maximum(a_hat @ (h @ w) + b[None, :], 0.0)
    return h


# --------------------------------- main ------------------------------------ #
if __name__ == "__main__":
    key = jax.random.PRNGKey(0)
    k_x, k_e, k_p = jax.random.split(key, 3)

    num_nodes = 16
    in_channels = 8
    hidden_channels = 32
    out_channels = 16
    num_edges = 40

    x = jax.random.normal(k_x, (num_nodes, in_channels), jnp.float32)
    edge_index = jax.random.randint(k_e, (2, num_edges), 0, num_nodes, jnp.int32)

    params = init_gnn_encoder_params(
        k_p, in_channels, hidden_channels, out_channels, num_layers=2
    )

    fwd = jax.jit(gnn_encoder_forward)
    out = jax.block_until_ready(fwd(params, x, edge_index))

    assert out.shape == (num_nodes, out_channels)
    assert bool(jnp.all(jnp.isfinite(out)))

    ref = _reference_forward(params, x, edge_index)
    assert bool(jnp.allclose(out, ref, rtol=5e-2, atol=5e-2)), "mismatch vs f32 reference"

    print("KERNEL_OK")
</pallas_src>

<mosaic_0001>
module attributes {stable_mosaic.version = 11 : i64} {
  func.func @_agg_kernel(%arg0: i32, %arg1: i32, %arg2: i32, %arg3: memref<128x128xbf16, #tpu.memory_space<vmem>>, %arg4: memref<128x128xbf16, #tpu.memory_space<vmem>>, %arg5: memref<1x128xf32, #tpu.memory_space<vmem>>, %arg6: memref<128x128xf32, #tpu.memory_space<vmem>>, %arg7: memref<128x128xf32, #tpu.memory_space<vmem>>) attributes {dimension_semantics = [#tpu.dimension_semantics<parallel>, #tpu.dimension_semantics<parallel>, #tpu.dimension_semantics<arbitrary>], iteration_bounds = array<i64: 1, 1, 1>, scalar_prefetch = 0 : i64, scratch_operands = 1 : i64, tpu.core_type = #tpu.core_type<tc>, window_params = [{transform_indices = @transform_0, window_bounds = array<i64: 128, 128>}, {transform_indices = @transform_1, window_bounds = array<i64: 128, 128>}, {transform_indices = @transform_2, window_bounds = array<i64: 1, 128>}, {transform_indices = @transform_3, window_bounds = array<i64: 128, 128>}]} {
    %c0_i32 = arith.constant 0 : i32
    %0 = arith.cmpi eq, %arg2, %c0_i32 : i32
    %1 = arith.extui %0 : i1 to i32
    %c0_i32_0 = arith.constant 0 : i32
    %2 = arith.cmpi ne, %1, %c0_i32_0 : i32
    scf.if %2 {
      %cst_10 = arith.constant 0.000000e+00 : f32
      %12 = vector.broadcast %cst_10 : f32 to vector<128x128xf32>
      %c0_11 = arith.constant 0 : index
      %c0_12 = arith.constant 0 : index
      %13 = vector.load %arg7[%c0_11, %c0_12] : memref<128x128xf32, #tpu.memory_space<vmem>>, vector<128x128xf32>
      tpu.vector_store %arg7[%c0_11, %c0_12], %12 {strides = array<i32>} : memref<128x128xf32, #tpu.memory_space<vmem>>, vector<128x128xf32>,
    } else {
    }
    %c0 = arith.constant 0 : index
    %c0_1 = arith.constant 0 : index
    %3 = vector.load %arg7[%c0, %c0_1] : memref<128x128xf32, #tpu.memory_space<vmem>>, vector<128x128xf32>
    %c0_2 = arith.constant 0 : index
    %c0_3 = arith.constant 0 : index
    %4 = vector.load %arg3[%c0_2, %c0_3] : memref<128x128xbf16, #tpu.memory_space<vmem>>, vector<128x128xbf16>
    %c0_4 = arith.constant 0 : index
    %c0_5 = arith.constant 0 : index
    %5 = vector.load %arg4[%c0_4, %c0_5] : memref<128x128xbf16, #tpu.memory_space<vmem>>, vector<128x128xbf16>
    %cst = arith.constant dense<0.000000e+00> : vector<128x128xf32>
    %6 = tpu.matmul %4, %5, %cst {dimension_numbers = #tpu.dot_dimension_numbers<[1], [0], [0], [1], [0, 0, 1, 1], [], []>} : vector<128x128xbf16>, vector<128x128xbf16>, vector<128x128xf32> -> vector<128x128xf32>
    %7 = arith.addf %3, %6 : vector<128x128xf32>
    %c0_6 = arith.constant 0 : index
    %c0_7 = arith.constant 0 : index
    %8 = vector.load %arg7[%c0_6, %c0_7] : memref<128x128xf32, #tpu.memory_space<vmem>>, vector<128x128xf32>
    tpu.vector_store %arg7[%c0_6, %c0_7], %7 {strides = array<i32>} : memref<128x128xf32, #tpu.memory_space<vmem>>, vector<128x128xf32>,
    %c0_i32_8 = arith.constant 0 : i32
    %9 = arith.cmpi eq, %arg2, %c0_i32_8 : i32
    %10 = arith.extui %9 : i1 to i32
    %c0_i32_9 = arith.constant 0 : i32
    %11 = arith.cmpi ne, %10, %c0_i32_9 : i32
    scf.if %11 {
      %c0_10 = arith.constant 0 : index
      %c0_11 = arith.constant 0 : index
      %12 = vector.load %arg7[%c0_10, %c0_11] : memref<128x128xf32, #tpu.memory_space<vmem>>, vector<128x128xf32>
      %c0_12 = arith.constant 0 : index
      %c0_13 = arith.constant 0 : index
      %13 = vector.load %arg5[%c0_12, %c0_13] : memref<1x128xf32, #tpu.memory_space<vmem>>, vector<1x128xf32>
      %14 = vector.broadcast %13 : vector<1x128xf32> to vector<128x128xf32>
      %15 = arith.addf %12, %14 : vector<128x128xf32>
      %cst_14 = arith.constant 0.000000e+00 : f32
      %16 = vector.broadcast %cst_14 : f32 to vector<128x128xf32>
      %17 = arith.maximumf %15, %16 : vector<128x128xf32>
      %c0_15 = arith.constant 0 : index
      %c0_16 = arith.constant 0 : index
      %18 = vector.load %arg6[%c0_15, %c0_16] : memref<128x128xf32, #tpu.memory_space<vmem>>, vector<128x128xf32>
      tpu.vector_store %arg6[%c0_15, %c0_16], %17 {strides = array<i32>} : memref<128x128xf32, #tpu.memory_space<vmem>>, vector<128x128xf32>,
    } else {
    }
    return
  }
  func.func @transform_0(%arg0: i32, %arg1: i32, %arg2: i32) -> (i32, i32) {
    %c0_i32 = arith.constant 0 : i32
    return %arg0, %arg2 : i32, i32
  }
  func.func @transform_1(%arg0: i32, %arg1: i32, %arg2: i32) -> (i32, i32) {
    %c0_i32 = arith.constant 0 : i32
    return %arg2, %arg1 : i32, i32
  }
  func.func @transform_2(%arg0: i32, %arg1: i32, %arg2: i32) -> (i32, i32) {
    %c0_i32 = arith.constant 0 : i32
    %c0_i32_0 = arith.constant 0 : i32
    return %c0_i32, %arg1 : i32, i32
  }
  func.func @transform_3(%arg0: i32, %arg1: i32, %arg2: i32) -> (i32, i32) {
    %c0_i32 = arith.constant 0 : i32
    return %arg0, %arg1 : i32, i32
  }
}

module attributes {stable_mosaic.version = 11 : i64} {
  func.func @_xw_kernel(%arg0: i32, %arg1: i32, %arg2: memref<128x128xbf16, #tpu.memory_space<vmem>>, %arg3: memref<128x128xbf16, #tpu.memory_space<vmem>>, %arg4: memref<128x128xbf16, #tpu.memory_space<vmem>>) attributes {dimension_semantics = [#tpu.dimension_semantics<parallel>, #tpu.dimension_semantics<parallel>], iteration_bounds = array<i64: 1, 1>, scalar_prefetch = 0 : i64, scratch_operands = 0 : i64, tpu.core_type = #tpu.core_type<tc>, window_params = [{transform_indices = @transform_0, window_bounds = array<i64: 128, 128>}, {transform_indices = @transform_1, window_bounds = array<i64: 128, 128>}, {transform_indices = @transform_2, window_bounds = array<i64: 128, 128>}]} {
    %c0 = arith.constant 0 : index
    %c0_0 = arith.constant 0 : index
    %0 = vector.load %arg2[%c0, %c0_0] : memref<128x128xbf16, #tpu.memory_space<vmem>>, vector<128x128xbf16>
    %c0_1 = arith.constant 0 : index
    %c0_2 = arith.constant 0 : index
    %1 = vector.load %arg3[%c0_1, %c0_2] : memref<128x128xbf16, #tpu.memory_space<vmem>>, vector<128x128xbf16>
    %cst = arith.constant dense<0.000000e+00> : vector<128x128xf32>
    %2 = tpu.matmul %0, %1, %cst {dimension_numbers = #tpu.dot_dimension_numbers<[1], [0], [0], [1], [0, 0, 1, 1], [], []>} : vector<128x128xbf16>, vector<128x128xbf16>, vector<128x128xf32> -> vector<128x128xf32>
    %3 = arith.truncf %2 : vector<128x128xf32> to vector<128x128xbf16>
    %c0_3 = arith.constant 0 : index
    %c0_4 = arith.constant 0 : index
    %4 = vector.load %arg4[%c0_3, %c0_4] : memref<128x128xbf16, #tpu.memory_space<vmem>>, vector<128x128xbf16>
    tpu.vector_store %arg4[%c0_3, %c0_4], %3 {strides = array<i32>} : memref<128x128xbf16, #tpu.memory_space<vmem>>, vector<128x128xbf16>,
    return
  }
  func.func @transform_0(%arg0: i32, %arg1: i32) -> (i32, i32) {
    %c0_i32 = arith.constant 0 : i32
    %c0_i32_0 = arith.constant 0 : i32
    return %arg0, %c0_i32 : i32, i32
  }
  func.func @transform_1(%arg0: i32, %arg1: i32) -> (i32, i32) {
    %c0_i32 = arith.constant 0 : i32
    %c0_i32_0 = arith.constant 0 : i32
    return %c0_i32, %arg1 : i32, i32
  }
  func.func @transform_2(%arg0: i32, %arg1: i32) -> (i32, i32) {
    %c0_i32 = arith.constant 0 : i32
    return %arg0, %arg1 : i32, i32
  }
}

</mosaic_0001>

<llo_original>
// kernel: gnn_encoder_forward.4
$region0: #{gnn_encoder_forward.4}
  #allocation0 [shape = 'u32[]', space=smem, size = 0x4, offset = 0x4, fixed_abs, tag = 'smem constant byte address 0x4 - core index']
  #allocation1 [shape = 'u32[144,128]{1,0:T(1,128)}', space=vmem, size = 0x12000, scoped, tag = 'internal scratch']
  %s0 = inlined_call_operand.vmem [shape: bf16[128,128], index: 0, kind: input, shape index: {}]
  %s1 = inlined_call_operand.vmem [shape: bf16[128,128], index: 1, kind: input, shape index: {}]
  %s2 = inlined_call_operand.vmem [shape: bf16[128,128], index: 2, kind: output, shape index: {}]
  %s3 = sld [smem:[#allocation0]]
  $region18: #{gnn_encoder_forward.4} parent=0
    _
  %s5 = ssub.s32 1, %s3
  %s6 = scalar_select 0, %s5, %s3
  // Predicated region
  $region2: #{gnn_encoder_forward.4} parent=0 // pred_check
    _
  $region3: #{gnn_encoder_forward.4} parent=0 // pred_check_branch
    %8 = sbr.rel (0) target = $region5
  $region4: #{gnn_encoder_forward.4} parent=0 // pred_region
    _
  $region5: #{gnn_encoder_forward.4} parent=0 // pred_fallthru
    _
  // Predicated region
  $region6: #{gnn_encoder_forward.4} parent=0 // pred_check
    _
  $region7: #{gnn_encoder_forward.4} parent=0 // pred_check_branch
    %10 = sbr.rel (0) target = $region9
  $region8: #{gnn_encoder_forward.4} parent=0 // pred_region
    _
  $region9: #{gnn_encoder_forward.4} parent=0 // pred_fallthru
    _
  %v12 = vld [vmem:[%s0] sm:$0xf]
  %v13 = vld [vmem:[%s0 + $0x4] sm:$0xf]
  %v14 = vld [vmem:[%s0 + $0x8] sm:$0xf]
  %v15 = vld [vmem:[%s0 + $0xc] sm:$0xf]
  %v16 = vld [vmem:[%s0 + $0x10] sm:$0xf]
  %v17 = vld [vmem:[%s0 + $0x14] sm:$0xf]
  %v18 = vld [vmem:[%s0 + $0x18] sm:$0xf]
  %v19 = vld [vmem:[%s0 + $0x1c] sm:$0xf]
  %v20 = vld [vmem:[%s0 + $0x20] sm:$0xf]
  %v21 = vld [vmem:[%s0 + $0x24] sm:$0xf]
  %v22 = vld [vmem:[%s0 + $0x28] sm:$0xf]
  %v23 = vld [vmem:[%s0 + $0x2c] sm:$0xf]
  %v24 = vld [vmem:[%s0 + $0x30] sm:$0xf]
  %v25 = vld [vmem:[%s0 + $0x34] sm:$0xf]
  %v26 = vld [vmem:[%s0 + $0x38] sm:$0xf]
  %v27 = vld [vmem:[%s0 + $0x3c] sm:$0xf]
  %v28 = vld [vmem:[%s1] sm:$0xf]
  %v29 = vld [vmem:[%s1 + $0x4] sm:$0xf]
  %v30 = vld [vmem:[%s1 + $0x8] sm:$0xf]
  %v31 = vld [vmem:[%s1 + $0xc] sm:$0xf]
  %v32 = vld [vmem:[%s1 + $0x10] sm:$0xf]
  %v33 = vld [vmem:[%s1 + $0x14] sm:$0xf]
  %v34 = vld [vmem:[%s1 + $0x18] sm:$0xf]
  %v35 = vld [vmem:[%s1 + $0x1c] sm:$0xf]
  %v36 = vld [vmem:[%s1 + $0x20] sm:$0xf]
  %v37 = vld [vmem:[%s1 + $0x24] sm:$0xf]
  %v38 = vld [vmem:[%s1 + $0x28] sm:$0xf]
  %v39 = vld [vmem:[%s1 + $0x2c] sm:$0xf]
  %v40 = vld [vmem:[%s1 + $0x30] sm:$0xf]
  %v41 = vld [vmem:[%s1 + $0x34] sm:$0xf]
  %v42 = vld [vmem:[%s1 + $0x38] sm:$0xf]
  %v43 = vld [vmem:[%s1 + $0x3c] sm:$0xf]
  %v60 = vunpack.c.l.b16 %v12
  %v61 = vunpack.c.l.b16 %v13
  %v62 = vunpack.c.l.b16 %v14
  %v63 = vunpack.c.l.b16 %v15
  %v64 = vunpack.c.l.b16 %v16
  %v65 = vunpack.c.l.b16 %v17
  %v66 = vunpack.c.l.b16 %v18
  %v67 = vunpack.c.l.b16 %v19
  %v68 = vunpack.c.l.b16 %v20
  %v69 = vunpack.c.l.b16 %v21
  %v70 = vunpack.c.l.b16 %v22
  %v71 = vunpack.c.l.b16 %v23
  %v72 = vunpack.c.l.b16 %v24
  %v73 = vunpack.c.l.b16 %v25
  %v74 = vunpack.c.l.b16 %v26
  %v75 = vunpack.c.l.b16 %v27
  %v76 = vpack.c.b16 %v61, %v60
  %v77 = vpack.c.b16 %v63, %v62
  %v78 = vpack.c.b16 %v65, %v64
  %v79 = vpack.c.b16 %v67, %v66
  %v80 = vpack.c.b16 %v69, %v68
  %v81 = vpack.c.b16 %v71, %v70
  %v82 = vpack.c.b16 %v73, %v72
  %v83 = vpack.c.b16 %v75, %v74
  %v108 = vunpack.c.l.b16 %v28
  %v109 = vunpack.c.l.b16 %v29
  %v110 = vunpack.c.l.b16 %v30
  %v111 = vunpack.c.l.b16 %v31
  %v112 = vunpack.c.l.b16 %v32
  %v113 = vunpack.c.l.b16 %v33
  %v114 = vunpack.c.l.b16 %v34
  %v115 = vunpack.c.l.b16 %v35
  %v116 = vunpack.c.l.b16 %v36
  %v117 = vunpack.c.l.b16 %v37
  %v118 = vunpack.c.l.b16 %v38
  %v119 = vunpack.c.l.b16 %v39
  %v120 = vunpack.c.l.b16 %v40
  %v121 = vunpack.c.l.b16 %v41
  %v122 = vunpack.c.l.b16 %v42
  %v123 = vunpack.c.l.b16 %v43
  %v124 = vpack.c.b16 %v109, %v108
  %v125 = vpack.c.b16 %v111, %v110
  %v126 = vpack.c.b16 %v113, %v112
  %v127 = vpack.c.b16 %v115, %v114
  %v128 = vpack.c.b16 %v117, %v116
  %v129 = vpack.c.b16 %v119, %v118
  %v130 = vpack.c.b16 %v121, %v120
  %v131 = vpack.c.b16 %v123, %v122
  %140 = vmatprep.subr.bf16.mxu0 0
  %141 = vmatpush1.bf16.msra.mxu0 %v124
  %142 = vmatprep.subr.bf16.mxu0 0
  %143 = vmatpush1.bf16.msra.mxu0 %v125
  %144 = vmatprep.subr.bf16.mxu0 0
  %145 = vmatpush1.bf16.msra.mxu0 %v126
  %146 = vmatprep.subr.bf16.mxu0 0
  %147 = vmatpush1.bf16.msra.mxu0 %v127
  %148 = vmatprep.subr.bf16.mxu0 0
  %149 = vmatpush1.bf16.msra.mxu0 %v128
  %150 = vmatprep.subr.bf16.mxu0 0
  %151 = vmatpush1.bf16.msra.mxu0 %v129
  %152 = vmatprep.subr.bf16.mxu0 0
  %153 = vmatpush1.bf16.msra.mxu0 %v130
  %154 = vmatprep.subr.bf16.mxu0 0
  %155 = vmatpush1.bf16.msra.mxu0 %v131
  %156 = vmatprep.subr.bf16.mxu0 0
  %157 = vmatpush1.bf16.msra.mxu0 0
  %158 = vmatprep.subr.bf16.mxu0 0
  %159 = vmatpush1.bf16.msra.mxu0 0
  %160 = vmatprep.subr.bf16.mxu0 0
  %161 = vmatpush1.bf16.msra.mxu0 0
  %162 = vmatprep.subr.bf16.mxu0 0
  %163 = vmatpush1.bf16.msra.mxu0 0
  %164 = vmatprep.subr.bf16.mxu0 0
  %165 = vmatpush1.bf16.msra.mxu0 0
  %166 = vmatprep.subr.bf16.mxu0 0
  %167 = vmatpush1.bf16.msra.mxu0 0
  %168 = vmatprep.subr.bf16.mxu0 0
  %169 = vmatpush1.bf16.msra.mxu0 0
  %170 = vmatprep.subr.bf16.mxu0 0
  %171 = vmatpush1.bf16.msra.mxu0 0
  %172 = vmatprep.mubr.bf16.mxu0 0
  %173 = vmatmul.mubr.bf16.gmra.mrb[0].mxu0 %v76
  %v174 = vpop.f32.mrb[0].mxu0
  %v175 = vadd.f32 0.0, %v174
  %v176 = vpop.f32.mrb[0].mxu0
  %v177 = vpop.f32.mrb[0].mxu0
  %v178 = vadd.f32 0.0, %v177
  %v179 = vpop.f32.mrb[0].mxu0
  %180 = vmatprep.mubr.bf16.mxu0 0
  %181 = vmatmul.mubr.bf16.gmra.mrb[0].mxu0 %v77
  %v182 = vpop.f32.mrb[0].mxu0
  %v183 = vadd.f32 0.0, %v182
  %v184 = vpop.f32.mrb[0].mxu0
  %v185 = vpop.f32.mrb[0].mxu0
  %v186 = vadd.f32 0.0, %v185
  %v187 = vpop.f32.mrb[0].mxu0
  %188 = vmatprep.mubr.bf16.mxu0 0
  %189 = vmatmul.mubr.bf16.gmra.mrb[0].mxu0 %v78
  %v190 = vpop.f32.mrb[0].mxu0
  %v191 = vadd.f32 0.0, %v190
  %v192 = vpop.f32.mrb[0].mxu0
  %v193 = vpop.f32.mrb[0].mxu0
  %v194 = vadd.f32 0.0, %v193
  %v195 = vpop.f32.mrb[0].mxu0
  %196 = vmatprep.mubr.bf16.mxu0 0
  %197 = vmatmul.mubr.bf16.gmra.mrb[0].mxu0 %v79
  %v198 = vpop.f32.mrb[0].mxu0
  %v199 = vadd.f32 0.0, %v198
  %v200 = vpop.f32.mrb[0].mxu0
  %v201 = vpop.f32.mrb[0].mxu0
  %v202 = vadd.f32 0.0, %v201
  %v203 = vpop.f32.mrb[0].mxu0
  %204 = vmatprep.mubr.bf16.mxu0 0
  %205 = vmatmul.mubr.bf16.gmra.mrb[0].mxu0 %v80
  %v206 = vpop.f32.mrb[0].mxu0
  %v207 = vadd.f32 0.0, %v206
  %v208 = vpop.f32.mrb[0].mxu0
  %v209 = vpop.f32.mrb[0].mxu0
  %v210 = vadd.f32 0.0, %v209
  %v211 = vpop.f32.mrb[0].mxu0
  %212 = vmatprep.mubr.bf16.mxu0 0
  %213 = vmatmul.mubr.bf16.gmra.mrb[0].mxu0 %v81
  %v214 = vpop.f32.mrb[0].mxu0
  %v215 = vadd.f32 0.0, %v214
  %v216 = vpop.f32.mrb[0].mxu0
  %v217 = vpop.f32.mrb[0].mxu0
  %v218 = vadd.f32 0.0, %v217
  %v219 = vpop.f32.mrb[0].mxu0
  %220 = vmatprep.mubr.bf16.mxu0 0
  %221 = vmatmul.mubr.bf16.gmra.mrb[0].mxu0 %v82
  %v222 = vpop.f32.mrb[0].mxu0
  %v223 = vadd.f32 0.0, %v222
  %v224 = vpop.f32.mrb[0].mxu0
  %v225 = vpop.f32.mrb[0].mxu0
  %v226 = vadd.f32 0.0, %v225
  %v227 = vpop.f32.mrb[0].mxu0
  %228 = vmatprep.mubr.bf16.mxu0 0
  %229 = vmatmul.mubr.bf16.gmra.mrb[0].mxu0 %v83
  %v230 = vpop.f32.mrb[0].mxu0
  %v231 = vadd.f32 0.0, %v230
  %v232 = vpop.f32.mrb[0].mxu0
  %v233 = vpop.f32.mrb[0].mxu0
  %v234 = vadd.f32 0.0, %v233
  %v235 = vpop.f32.mrb[0].mxu0
  %236 = vdwg.mxu0
  %v237 = vpack.c.bf16 %v178, %v175
  %v238 = vpack.c.bf16 %v186, %v183
  %v239 = vpack.c.bf16 %v194, %v191
  %v240 = vpack.c.bf16 %v202, %v199
  %v241 = vpack.c.bf16 %v210, %v207
  %v242 = vpack.c.bf16 %v218, %v215
  %v243 = vpack.c.bf16 %v226, %v223
  %v244 = vpack.c.bf16 %v234, %v231
  %v253 = vunpack.c.l.b16 %v237
  %v254 = vunpack.c.h.b16 %v237
  %v255 = vunpack.c.l.b16 %v238
  %v256 = vunpack.c.h.b16 %v238
  %v257 = vunpack.c.l.b16 %v239
  %v258 = vunpack.c.h.b16 %v239
  %v259 = vunpack.c.l.b16 %v240
  %v260 = vunpack.c.h.b16 %v240
  %v261 = vunpack.c.l.b16 %v241
  %v262 = vunpack.c.h.b16 %v241
  %v263 = vunpack.c.l.b16 %v242
  %v264 = vunpack.c.h.b16 %v242
  %v265 = vunpack.c.l.b16 %v243
  %v266 = vunpack.c.h.b16 %v243
  %v267 = vunpack.c.l.b16 %v244
  %v268 = vunpack.c.h.b16 %v244
  %v269 = vpack.c.b16 %v253, %v253
  %v270 = vpack.c.b16 %v254, %v254
  %v271 = vpack.c.b16 %v255, %v255
  %v272 = vpack.c.b16 %v256, %v256
  %v273 = vpack.c.b16 %v257, %v257
  %v274 = vpack.c.b16 %v258, %v258
  %v275 = vpack.c.b16 %v259, %v259
  %v276 = vpack.c.b16 %v260, %v260
  %v277 = vpack.c.b16 %v261, %v261
  %v278 = vpack.c.b16 %v262, %v262
  %v279 = vpack.c.b16 %v263, %v263
  %v280 = vpack.c.b16 %v264, %v264
  %v281 = vpack.c.b16 %v265, %v265
  %v282 = vpack.c.b16 %v266, %v266
  %v283 = vpack.c.b16 %v267, %v267
  %v284 = vpack.c.b16 %v268, %v268
  %301 = vst [vmem:[%s2] sm:$0xf] %v269
  %302 = vst [vmem:[%s2 + $0x4] sm:$0xf] %v270
  %303 = vst [vmem:[%s2 + $0x8] sm:$0xf] %v271
  %304 = vst [vmem:[%s2 + $0xc] sm:$0xf] %v272
  %305 = vst [vmem:[%s2 + $0x10] sm:$0xf] %v273
  %306 = vst [vmem:[%s2 + $0x14] sm:$0xf] %v274
  %307 = vst [vmem:[%s2 + $0x18] sm:$0xf] %v275
  %308 = vst [vmem:[%s2 + $0x1c] sm:$0xf] %v276
  %309 = vst [vmem:[%s2 + $0x20] sm:$0xf] %v277
  %310 = vst [vmem:[%s2 + $0x24] sm:$0xf] %v278
  %311 = vst [vmem:[%s2 + $0x28] sm:$0xf] %v279
  %312 = vst [vmem:[%s2 + $0x2c] sm:$0xf] %v280
  %313 = vst [vmem:[%s2 + $0x30] sm:$0xf] %v281
  %314 = vst [vmem:[%s2 + $0x34] sm:$0xf] %v282
  %315 = vst [vmem:[%s2 + $0x38] sm:$0xf] %v283
  %316 = vst [vmem:[%s2 + $0x3c] sm:$0xf] %v284
  // Predicated region
  $region10: #{gnn_encoder_forward.4} parent=0 // pred_check
    _
  $region11: #{gnn_encoder_forward.4} parent=0 // pred_check_branch
    %318 = sbr.rel (0) target = $region13
  $region12: #{gnn_encoder_forward.4} parent=0 // pred_region
    _
  $region13: #{gnn_encoder_forward.4} parent=0 // pred_fallthru
    _
  // Predicated region
  $region14: #{gnn_encoder_forward.4} parent=0 // pred_check
    _
  $region15: #{gnn_encoder_forward.4} parent=0 // pred_check_branch
    %320 = sbr.rel (0) target = $region17
  $region16: #{gnn_encoder_forward.4} parent=0 // pred_region
    _
  $region17: #{gnn_encoder_forward.4} parent=0 // pred_fallthru
    _

// kernel: gnn_encoder_forward.5
$region0: #{gnn_encoder_forward.5}
  #allocation0 [shape = 'u32[]', space=smem, size = 0x4, offset = 0x4, fixed_abs, tag = 'smem constant byte address 0x4 - core index']
  #allocation1 [shape = 'u32[144,128]{1,0:T(1,128)}', space=vmem, size = 0x12000, scoped, tag = 'internal scratch']
  #allocation2 [shape = 'f32[128,128]{1,0:T(8,128)}', space=vmem, size = 0x10000, scoped, tag = 'scratch operand']
  %s0 = inlined_call_operand.vmem [shape: bf16[128,128], index: 0, kind: input, shape index: {}]
  %s1 = inlined_call_operand.vmem [shape: bf16[128,128], index: 1, kind: input, shape index: {}]
  %s2 = inlined_call_operand.vmem [shape: f32[1,128], index: 2, kind: input, shape index: {}]
  %s3 = inlined_call_operand.vmem [shape: f32[128,128], index: 3, kind: output, shape index: {}]
  %s4 = sld [smem:[#allocation0]]
  $region30: #{gnn_encoder_forward.5} parent=0
    _
  %s6 = ssub.s32 1, %s4
  %s7 = scalar_select 0, %s6, %s4
  // Predicated region
  $region2: #{gnn_encoder_forward.5} parent=0 // pred_check
    _
  $region3: #{gnn_encoder_forward.5} parent=0 // pred_check_branch
    %9 = sbr.rel (0) target = $region5
  $region4: #{gnn_encoder_forward.5} parent=0 // pred_region
    _
  $region5: #{gnn_encoder_forward.5} parent=0 // pred_fallthru
    _
  // Predicated region
  $region6: #{gnn_encoder_forward.5} parent=0 // pred_check
    _
  $region7: #{gnn_encoder_forward.5} parent=0 // pred_check_branch
    %11 = sbr.rel (0) target = $region9
  $region8: #{gnn_encoder_forward.5} parent=0 // pred_region
    _
  $region9: #{gnn_encoder_forward.5} parent=0 // pred_fallthru
    _
  // Predicated region
  $region10: #{gnn_encoder_forward.5} parent=0 // pred_check
    _
  $region11: #{gnn_encoder_forward.5} parent=0 // pred_check_branch
    %13 = sbr.rel (0) target = $region13
  $region12: #{gnn_encoder_forward.5} parent=0 // pred_region
    _
  $region13: #{gnn_encoder_forward.5} parent=0 // pred_fallthru
    _
  %p15 = scmp.eq.s32.totalorder 0, 0
  // Predicated region
  $region14: #{gnn_encoder_forward.5} parent=0 // pred_check
    %p16 = pneg %p15
  $region15: #{gnn_encoder_forward.5} parent=0 // pred_check_branch
    %18 = sbr.rel (%p16) target = $region17
  $region16: #{gnn_encoder_forward.5} parent=0 // pred_region
    %19 = vst [vmem:[#allocation2] sm:$0xff] 0.0
    %20 = vst [vmem:[#allocation2 + $0x8] sm:$0xff] 0.0
    %21 = vst [vmem:[#allocation2 + $0x10] sm:$0xff] 0.0
    %22 = vst [vmem:[#allocation2 + $0x18] sm:$0xff] 0.0
    %23 = vst [vmem:[#allocation2 + $0x20] sm:$0xff] 0.0
    %24 = vst [vmem:[#allocation2 + $0x28] sm:$0xff] 0.0
    %25 = vst [vmem:[#allocation2 + $0x30] sm:$0xff] 0.0
    %26 = vst [vmem:[#allocation2 + $0x38] sm:$0xff] 0.0
    %27 = vst [vmem:[#allocation2 + $0x40] sm:$0xff] 0.0
    %28 = vst [vmem:[#allocation2 + $0x48] sm:$0xff] 0.0
    %29 = vst [vmem:[#allocation2 + $0x50] sm:$0xff] 0.0
    %30 = vst [vmem:[#allocation2 + $0x58] sm:$0xff] 0.0
    %31 = vst [vmem:[#allocation2 + $0x60] sm:$0xff] 0.0
    %32 = vst [vmem:[#allocation2 + $0x68] sm:$0xff] 0.0
    %33 = vst [vmem:[#allocation2 + $0x70] sm:$0xff] 0.0
    %34 = vst [vmem:[#allocation2 + $0x78] sm:$0xff] 0.0
  $region17: #{gnn_encoder_forward.5} parent=0 // pred_fallthru
    _
  %v35 = vld [vmem:[#allocation2] sm:$0xff]
  %v36 = vld [vmem:[#allocation2 + $0x8] sm:$0xff]
  %v37 = vld [vmem:[#allocation2 + $0x10] sm:$0xff]
  %v38 = vld [vmem:[#allocation2 + $0x18] sm:$0xff]
  %v39 = vld [vmem:[#allocation2 + $0x20] sm:$0xff]
  %v40 = vld [vmem:[#allocation2 + $0x28] sm:$0xff]
  %v41 = vld [vmem:[#allocation2 + $0x30] sm:$0xff]
  %v42 = vld [vmem:[#allocation2 + $0x38] sm:$0xff]
  %v43 = vld [vmem:[#allocation2 + $0x40] sm:$0xff]
  %v44 = vld [vmem:[#allocation2 + $0x48] sm:$0xff]
  %v45 = vld [vmem:[#allocation2 + $0x50] sm:$0xff]
  %v46 = vld [vmem:[#allocation2 + $0x58] sm:$0xff]
  %v47 = vld [vmem:[#allocation2 + $0x60] sm:$0xff]
  %v48 = vld [vmem:[#allocation2 + $0x68] sm:$0xff]
  %v49 = vld [vmem:[#allocation2 + $0x70] sm:$0xff]
  %v50 = vld [vmem:[#allocation2 + $0x78] sm:$0xff]
  %v51 = vld [vmem:[%s0] sm:$0xf]
  %v52 = vld [vmem:[%s0 + $0x4] sm:$0xf]
  %v53 = vld [vmem:[%s0 + $0x8] sm:$0xf]
  %v54 = vld [vmem:[%s0 + $0xc] sm:$0xf]
  %v55 = vld [vmem:[%s0 + $0x10] sm:$0xf]
  %v56 = vld [vmem:[%s0 + $0x14] sm:$0xf]
  %v57 = vld [vmem:[%s0 + $0x18] sm:$0xf]
  %v58 = vld [vmem:[%s0 + $0x1c] sm:$0xf]
  %v59 = vld [vmem:[%s0 + $0x20] sm:$0xf]
  %v60 = vld [vmem:[%s0 + $0x24] sm:$0xf]
  %v61 = vld [vmem:[%s0 + $0x28] sm:$0xf]
  %v62 = vld [vmem:[%s0 + $0x2c] sm:$0xf]
  %v63 = vld [vmem:[%s0 + $0x30] sm:$0xf]
  %v64 = vld [vmem:[%s0 + $0x34] sm:$0xf]
  %v65 = vld [vmem:[%s0 + $0x38] sm:$0xf]
  %v66 = vld [vmem:[%s0 + $0x3c] sm:$0xf]
  %v67 = vld [vmem:[%s1] sm:$0xf]
  %v68 = vld [vmem:[%s1 + $0x4] sm:$0xf]
  %v69 = vld [vmem:[%s1 + $0x8] sm:$0xf]
  %v70 = vld [vmem:[%s1 + $0xc] sm:$0xf]
  %v71 = vld [vmem:[%s1 + $0x10] sm:$0xf]
  %v72 = vld [vmem:[%s1 + $0x14] sm:$0xf]
  %v73 = vld [vmem:[%s1 + $0x18] sm:$0xf]
  %v74 = vld [vmem:[%s1 + $0x1c] sm:$0xf]
  %v75 = vld [vmem:[%s1 + $0x20] sm:$0xf]
  %v76 = vld [vmem:[%s1 + $0x24] sm:$0xf]
  %v77 = vld [vmem:[%s1 + $0x28] sm:$0xf]
  %v78 = vld [vmem:[%s1 + $0x2c] sm:$0xf]
  %v79 = vld [vmem:[%s1 + $0x30] sm:$0xf]
  %v80 = vld [vmem:[%s1 + $0x34] sm:$0xf]
  %v81 = vld [vmem:[%s1 + $0x38] sm:$0xf]
  %v82 = vld [vmem:[%s1 + $0x3c] sm:$0xf]
  %v99 = vunpack.c.l.b16 %v51
  %v100 = vunpack.c.l.b16 %v52
  %v101 = vunpack.c.l.b16 %v53
  %v102 = vunpack.c.l.b16 %v54
  %v103 = vunpack.c.l.b16 %v55
  %v104 = vunpack.c.l.b16 %v56
  %v105 = vunpack.c.l.b16 %v57
  %v106 = vunpack.c.l.b16 %v58
  %v107 = vunpack.c.l.b16 %v59
  %v108 = vunpack.c.l.b16 %v60
  %v109 = vunpack.c.l.b16 %v61
  %v110 = vunpack.c.l.b16 %v62
  %v111 = vunpack.c.l.b16 %v63
  %v112 = vunpack.c.l.b16 %v64
  %v113 = vunpack.c.l.b16 %v65
  %v114 = vunpack.c.l.b16 %v66
  %v115 = vpack.c.b16 %v100, %v99
  %v116 = vpack.c.b16 %v102, %v101
  %v117 = vpack.c.b16 %v104, %v103
  %v118 = vpack.c.b16 %v106, %v105
  %v119 = vpack.c.b16 %v108, %v107
  %v120 = vpack.c.b16 %v110, %v109
  %v121 = vpack.c.b16 %v112, %v111
  %v122 = vpack.c.b16 %v114, %v113
  %v147 = vunpack.c.l.b16 %v67
  %v148 = vunpack.c.l.b16 %v68
  %v149 = vunpack.c.l.b16 %v69
  %v150 = vunpack.c.l.b16 %v70
  %v151 = vunpack.c.l.b16 %v71
  %v152 = vunpack.c.l.b16 %v72
  %v153 = vunpack.c.l.b16 %v73
  %v154 = vunpack.c.l.b16 %v74
  %v155 = vunpack.c.l.b16 %v75
  %v156 = vunpack.c.l.b16 %v76
  %v157 = vunpack.c.l.b16 %v77
  %v158 = vunpack.c.l.b16 %v78
  %v159 = vunpack.c.l.b16 %v79
  %v160 = vunpack.c.l.b16 %v80
  %v161 = vunpack.c.l.b16 %v81
  %v162 = vunpack.c.l.b16 %v82
  %v163 = vpack.c.b16 %v148, %v147
  %v164 = vpack.c.b16 %v150, %v149
  %v165 = vpack.c.b16 %v152, %v151
  %v166 = vpack.c.b16 %v154, %v153
  %v167 = vpack.c.b16 %v156, %v155
  %v168 = vpack.c.b16 %v158, %v157
  %v169 = vpack.c.b16 %v160, %v159
  %v170 = vpack.c.b16 %v162, %v161
  %179 = vmatprep.subr.bf16.mxu0 0
  %180 = vmatpush1.bf16.msra.mxu0 %v163
  %181 = vmatprep.subr.bf16.mxu0 0
  %182 = vmatpush1.bf16.msra.mxu0 %v164
  %183 = vmatprep.subr.bf16.mxu0 0
  %184 = vmatpush1.bf16.msra.mxu0 %v165
  %185 = vmatprep.subr.bf16.mxu0 0
  %186 = vmatpush1.bf16.msra.mxu0 %v166
  %187 = vmatprep.subr.bf16.mxu0 0
  %188 = vmatpush1.bf16.msra.mxu0 %v167
  %189 = vmatprep.subr.bf16.mxu0 0
  %190 = vmatpush1.bf16.msra.mxu0 %v168
  %191 = vmatprep.subr.bf16.mxu0 0
  %192 = vmatpush1.bf16.msra.mxu0 %v169
  %193 = vmatprep.subr.bf16.mxu0 0
  %194 = vmatpush1.bf16.msra.mxu0 %v170
  %195 = vmatprep.subr.bf16.mxu0 0
  %196 = vmatpush1.bf16.msra.mxu0 0
  %197 = vmatprep.subr.bf16.mxu0 0
  %198 = vmatpush1.bf16.msra.mxu0 0
  %199 = vmatprep.subr.bf16.mxu0 0
  %200 = vmatpush1.bf16.msra.mxu0 0
  %201 = vmatprep.subr.bf16.mxu0 0
  %202 = vmatpush1.bf16.msra.mxu0 0
  %203 = vmatprep.subr.bf16.mxu0 0
  %204 = vmatpush1.bf16.msra.mxu0 0
  %205 = vmatprep.subr.bf16.mxu0 0
  %206 = vmatpush1.bf16.msra.mxu0 0
  %207 = vmatprep.subr.bf16.mxu0 0
  %208 = vmatpush1.bf16.msra.mxu0 0
  %209 = vmatprep.subr.bf16.mxu0 0
  %210 = vmatpush1.bf16.msra.mxu0 0
  %211 = vmatprep.mubr.bf16.mxu0 0
  %212 = vmatmul.mubr.bf16.gmra.mrb[0].mxu0 %v115
  %v213 = vpop.f32.mrb[0].mxu0
  %v214 = vadd.f32 0.0, %v213
  %v215 = vpop.f32.mrb[0].mxu0
  %v216 = vpop.f32.mrb[0].mxu0
  %v217 = vadd.f32 0.0, %v216
  %v218 = vpop.f32.mrb[0].mxu0
  %219 = vmatprep.mubr.bf16.mxu0 0
  %220 = vmatmul.mubr.bf16.gmra.mrb[0].mxu0 %v116
  %v221 = vpop.f32.mrb[0].mxu0
  %v222 = vadd.f32 0.0, %v221
  %v223 = vpop.f32.mrb[0].mxu0
  %v224 = vpop.f32.mrb[0].mxu0
  %v225 = vadd.f32 0.0, %v224
  %v226 = vpop.f32.mrb[0].mxu0
  %227 = vmatprep.mubr.bf16.mxu0 0
  %228 = vmatmul.mubr.bf16.gmra.mrb[0].mxu0 %v117
  %v229 = vpop.f32.mrb[0].mxu0
  %v230 = vadd.f32 0.0, %v229
  %v231 = vpop.f32.mrb[0].mxu0
  %v232 = vpop.f32.mrb[0].mxu0
  %v233 = vadd.f32 0.0, %v232
  %v234 = vpop.f32.mrb[0].mxu0
  %235 = vmatprep.mubr.bf16.mxu0 0
  %236 = vmatmul.mubr.bf16.gmra.mrb[0].mxu0 %v118
  %v237 = vpop.f32.mrb[0].mxu0
  %v238 = vadd.f32 0.0, %v237
  %v239 = vpop.f32.mrb[0].mxu0
  %v240 = vpop.f32.mrb[0].mxu0
  %v241 = vadd.f32 0.0, %v240
  %v242 = vpop.f32.mrb[0].mxu0
  %243 = vmatprep.mubr.bf16.mxu0 0
  %244 = vmatmul.mubr.bf16.gmra.mrb[0].mxu0 %v119
  %v245 = vpop.f32.mrb[0].mxu0
  %v246 = vadd.f32 0.0, %v245
  %v247 = vpop.f32.mrb[0].mxu0
  %v248 = vpop.f32.mrb[0].mxu0
  %v249 = vadd.f32 0.0, %v248
  %v250 = vpop.f32.mrb[0].mxu0
  %251 = vmatprep.mubr.bf16.mxu0 0
  %252 = vmatmul.mubr.bf16.gmra.mrb[0].mxu0 %v120
  %v253 = vpop.f32.mrb[0].mxu0
  %v254 = vadd.f32 0.0, %v253
  %v255 = vpop.f32.mrb[0].mxu0
  %v256 = vpop.f32.mrb[0].mxu0
  %v257 = vadd.f32 0.0, %v256
  %v258 = vpop.f32.mrb[0].mxu0
  %259 = vmatprep.mubr.bf16.mxu0 0
  %260 = vmatmul.mubr.bf16.gmra.mrb[0].mxu0 %v121
  %v261 = vpop.f32.mrb[0].mxu0
  %v262 = vadd.f32 0.0, %v261
  %v263 = vpop.f32.mrb[0].mxu0
  %v264 = vpop.f32.mrb[0].mxu0
  %v265 = vadd.f32 0.0, %v264
  %v266 = vpop.f32.mrb[0].mxu0
  %267 = vmatprep.mubr.bf16.mxu0 0
  %268 = vmatmul.mubr.bf16.gmra.mrb[0].mxu0 %v122
  %v269 = vpop.f32.mrb[0].mxu0
  %v270 = vadd.f32 0.0, %v269
  %v271 = vpop.f32.mrb[0].mxu0
  %v272 = vpop.f32.mrb[0].mxu0
  %v273 = vadd.f32 0.0, %v272
  %v274 = vpop.f32.mrb[0].mxu0
  %275 = vdwg.mxu0
  %v276 = vadd.f32 %v35, %v214
  %v277 = vadd.f32 %v36, %v217
  %v278 = vadd.f32 %v37, %v222
  %v279 = vadd.f32 %v38, %v225
  %v280 = vadd.f32 %v39, %v230
  %v281 = vadd.f32 %v40, %v233
  %v282 = vadd.f32 %v41, %v238
  %v283 = vadd.f32 %v42, %v241
  %v284 = vadd.f32 %v43, %v246
  %v285 = vadd.f32 %v44, %v249
  %v286 = vadd.f32 %v45, %v254
  %v287 = vadd.f32 %v46, %v257
  %v288 = vadd.f32 %v47, %v262
  %v289 = vadd.f32 %v48, %v265
  %v290 = vadd.f32 %v49, %v270
  %v291 = vadd.f32 %v50, %v273
  %292 = vst [vmem:[#allocation2] sm:$0xff] %v276
  %293 = vst [vmem:[#allocation2 + $0x8] sm:$0xff] %v277
  %294 = vst [vmem:[#allocation2 + $0x10] sm:$0xff] %v278
  %295 = vst [vmem:[#allocation2 + $0x18] sm:$0xff] %v279
  %296 = vst [vmem:[#allocation2 + $0x20] sm:$0xff] %v280
  %297 = vst [vmem:[#allocation2 + $0x28] sm:$0xff] %v281
  %298 = vst [vmem:[#allocation2 + $0x30] sm:$0xff] %v282
  %299 = vst [vmem:[#allocation2 + $0x38] sm:$0xff] %v283
  %300 = vst [vmem:[#allocation2 + $0x40] sm:$0xff] %v284
  %301 = vst [vmem:[#allocation2 + $0x48] sm:$0xff] %v285
  %302 = vst [vmem:[#allocation2 + $0x50] sm:$0xff] %v286
  %303 = vst [vmem:[#allocation2 + $0x58] sm:$0xff] %v287
  %304 = vst [vmem:[#allocation2 + $0x60] sm:$0xff] %v288
  %305 = vst [vmem:[#allocation2 + $0x68] sm:$0xff] %v289
  %306 = vst [vmem:[#allocation2 + $0x70] sm:$0xff] %v290
  %307 = vst [vmem:[#allocation2 + $0x78] sm:$0xff] %v291
  // Predicated region
  $region18: #{gnn_encoder_forward.5} parent=0 // pred_check
    %p308 = pneg %p15
  $region19: #{gnn_encoder_forward.5} parent=0 // pred_check_branch
    %310 = sbr.rel (%p308) target = $region21
  $region20: #{gnn_encoder_forward.5} parent=0 // pred_region
    %v311 = vld [vmem:[#allocation2] sm:$0xff]
    %v312 = vld [vmem:[#allocation2 + $0x8] sm:$0xff]
    %v313 = vld [vmem:[#allocation2 + $0x10] sm:$0xff]
    %v314 = vld [vmem:[#allocation2 + $0x18] sm:$0xff]
    %v315 = vld [vmem:[#allocation2 + $0x20] sm:$0xff]
    %v316 = vld [vmem:[#allocation2 + $0x28] sm:$0xff]
    %v317 = vld [vmem:[#allocation2 + $0x30] sm:$0xff]
    %v318 = vld [vmem:[#allocation2 + $0x38] sm:$0xff]
    %v319 = vld [vmem:[#allocation2 + $0x40] sm:$0xff]
    %v320 = vld [vmem:[#allocation2 + $0x48] sm:$0xff]
    %v321 = vld [vmem:[#allocation2 + $0x50] sm:$0xff]
    %v322 = vld [vmem:[#allocation2 + $0x58] sm:$0xff]
    %v323 = vld [vmem:[#allocation2 + $0x60] sm:$0xff]
    %v324 = vld [vmem:[#allocation2 + $0x68] sm:$0xff]
    %v325 = vld [vmem:[#allocation2 + $0x70] sm:$0xff]
    %v326 = vld [vmem:[#allocation2 + $0x78] sm:$0xff]
    %v327 = vld [vmem:[%s2] sm:$0x1]
    %v329 = vlaneseq
    %v330 = vshrl.u32 %v329, 7
    %v331 = vsub.s32 0, %v330
    %v332 = vrot.slane %v327, %v331
    %v334 = vadd.f32 %v311, %v332
    %v335 = vadd.f32 %v312, %v332
    %v336 = vadd.f32 %v313, %v332
    %v337 = vadd.f32 %v314, %v332
    %v338 = vadd.f32 %v315, %v332
    %v339 = vadd.f32 %v316, %v332
    %v340 = vadd.f32 %v317, %v332
    %v341 = vadd.f32 %v318, %v332
    %v342 = vadd.f32 %v319, %v332
    %v343 = vadd.f32 %v320, %v332
    %v344 = vadd.f32 %v321, %v332
    %v345 = vadd.f32 %v322, %v332
    %v346 = vadd.f32 %v323, %v332
    %v347 = vadd.f32 %v324, %v332
    %v348 = vadd.f32 %v325, %v332
    %v349 = vadd.f32 %v326, %v332
    %v350 = vmax.f32 %v334, 0.0
    %v351 = vmax.f32 %v335, 0.0
    %v352 = vmax.f32 %v336, 0.0
    %v353 = vmax.f32 %v337, 0.0
    %v354 = vmax.f32 %v338, 0.0
    %v355 = vmax.f32 %v339, 0.0
    %v356 = vmax.f32 %v340, 0.0
    %v357 = vmax.f32 %v341, 0.0
    %v358 = vmax.f32 %v342, 0.0
    %v359 = vmax.f32 %v343, 0.0
    %v360 = vmax.f32 %v344, 0.0
    %v361 = vmax.f32 %v345, 0.0
    %v362 = vmax.f32 %v346, 0.0
    %v363 = vmax.f32 %v347, 0.0
    %v364 = vmax.f32 %v348, 0.0
    %v365 = vmax.f32 %v349, 0.0
    %366 = vst [vmem:[%s3] sm:$0xff] %v350
    %367 = vst [vmem:[%s3 + $0x8] sm:$0xff] %v351
    %368 = vst [vmem:[%s3 + $0x10] sm:$0xff] %v352
    %369 = vst [vmem:[%s3 + $0x18] sm:$0xff] %v353
    %370 = vst [vmem:[%s3 + $0x20] sm:$0xff] %v354
    %371 = vst [vmem:[%s3 + $0x28] sm:$0xff] %v355
    %372 = vst [vmem:[%s3 + $0x30] sm:$0xff] %v356
    %373 = vst [vmem:[%s3 + $0x38] sm:$0xff] %v357
    %374 = vst [vmem:[%s3 + $0x40] sm:$0xff] %v358
    %375 = vst [vmem:[%s3 + $0x48] sm:$0xff] %v359
    %376 = vst [vmem:[%s3 + $0x50] sm:$0xff] %v360
    %377 = vst [vmem:[%s3 + $0x58] sm:$0xff] %v361
    %378 = vst [vmem:[%s3 + $0x60] sm:$0xff] %v362
    %379 = vst [vmem:[%s3 + $0x68] sm:$0xff] %v363
    %380 = vst [vmem:[%s3 + $0x70] sm:$0xff] %v364
    %381 = vst [vmem:[%s3 + $0x78] sm:$0xff] %v365
  $region21: #{gnn_encoder_forward.5} parent=0 // pred_fallthru
    _
  // Predicated region
  $region22: #{gnn_encoder_forward.5} parent=0 // pred_check
    _
  $region23: #{gnn_encoder_forward.5} parent=0 // pred_check_branch
    %383 = sbr.rel (0) target = $region25
  $region24: #{gnn_encoder_forward.5} parent=0 // pred_region
    _
  $region25: #{gnn_encoder_forward.5} parent=0 // pred_fallthru
    _
  // Predicated region
  $region26: #{gnn_encoder_forward.5} parent=0 // pred_check
    _
  $region27: #{gnn_encoder_forward.5} parent=0 // pred_check_branch
    %385 = sbr.rel (0) target = $region29
  $region28: #{gnn_encoder_forward.5} parent=0 // pred_region
    _
  $region29: #{gnn_encoder_forward.5} parent=0 // pred_fallthru
    _

</llo_original>
